<compile_context>
chip_gen: v5e
topology: v5e:2x2
jax: 0.10.0
libtpu: 0.0.40
codegen_flags: <defaults>
</compile_context>

<pallas_src>
import functools
import math

import jax
import jax.numpy as jnp
import numpy as np
from jax.experimental import pallas as pl
from jax.experimental.pallas import tpu as pltpu


def _round_up(x, m):
    return ((x + m - 1) // m) * m


# ----------------------------------------------------------------------------
# Fused kernel: per-batch-item CE + smooth-L1 + hard-negative mining partials.
# Layout: boxes on the 128-lane axis, classes / box coords on sublanes.
# ----------------------------------------------------------------------------
def _multibox_kernel(ct_ref, cp_ref, lp_ref, lt_ref, out_ref, *, n_boxes):
    """Blocks (boxes lane-dense):
      ct_ref : (1, 1, Np) int32   conf_t  (padded lanes MUST be class 0)
      cp_ref : (1, C, Np) float32 conf_p
      lp_ref : (1, 4, Np) float32 loc_p
      lt_ref : (1, 4, Np) float32 loc_t
      out_ref: (1, 1, 128) f32    lanes 0/1/2 = num_matched / loc_sum / ce_sum
    """
    ct = ct_ref[0]                                     # (1, Np) int32
    cp = cp_ref[0].astype(jnp.float32)                 # (C, Np)
    lp = lp_ref[0].astype(jnp.float32)                 # (4, Np)
    lt = lt_ref[0].astype(jnp.float32)                 # (4, Np)
    num_classes, n_pad = cp.shape

    j_idx = jax.lax.broadcasted_iota(jnp.int32, (1, n_pad), 1)
    valid = j_idx < n_boxes                            # padded lanes -> False
    pos = jnp.logical_and(ct > 0, valid)
    pos_f = pos.astype(jnp.float32)
    num_matched = jnp.sum(pos_f, axis=1, keepdims=True)            # (1, 1)

    # ---- Smooth-L1 localization loss summed over positive boxes ----
    d = lp - lt
    ad = jnp.abs(d)
    sl1 = jnp.where(ad < 1.0, 0.5 * d * d, ad - 0.5)               # (4, Np)
    loc_per_box = jnp.sum(sl1, axis=0, keepdims=True)              # (1, Np)
    loc_sum = jnp.sum(loc_per_box * pos_f, axis=1, keepdims=True)  # (1, 1)

    # ---- Per-box cross entropy: logsumexp(conf_p) - conf_p[target] ----
    # (classes on sublanes; gather fused into a masked sublane sum)
    m = jnp.max(cp, axis=0, keepdims=True)                         # (1, Np)
    lse = jnp.log(jnp.sum(jnp.exp(cp - m), axis=0, keepdims=True)) + m
    cls_idx = jax.lax.broadcasted_iota(jnp.int32, (num_classes, n_pad), 0)
    gathered = jnp.sum(jnp.where(cls_idx == ct, cp, 0.0),
                       axis=0, keepdims=True)                      # (1, Np)
    ce = jnp.where(valid, lse - gathered, 0.0)                     # (1, Np)

    # ---- Hard-negative mining via exact O(N log N) threshold selection ----
    # Mined values: positives zeroed.  Clamp to >= 0 so the f32 bit pattern is
    # an order-preserving int32 key (CE >= 0 mathematically; the clamp only
    # absorbs a possible -eps rounding artifact of lse - gathered).
    c_mined = jnp.maximum(jnp.where(pos, 0.0, ce), 0.0)
    u = pltpu.bitcast(c_mined, jnp.int32)                          # ordered key

    num_pos_i = jnp.sum(pos.astype(jnp.int32), axis=1, keepdims=True)
    num_neg = jnp.minimum(num_pos_i * 3, n_boxes - 1)              # clamp(max=N-1)

    # (a) radix search: T = largest key t with count(valid & u >= t) >= num_neg
    #     == the num_neg-th largest mined key (stable-descending position).
    def t_body(_, carry):
        t, bit = carry
        cand = jnp.bitwise_or(t, bit)
        cnt = jnp.sum((valid & (u >= cand)).astype(jnp.int32),
                      axis=1, keepdims=True)
        return jnp.where(cnt >= num_neg, cand, t), jnp.right_shift(bit, 1)

    t_thr, _ = jax.lax.fori_loop(
        0, 31, t_body,
        (jnp.zeros((1, 1), jnp.int32), jnp.full((1, 1), 1 << 30, jnp.int32)))

    cnt_gt = jnp.sum((valid & (u > t_thr)).astype(jnp.int32),
                     axis=1, keepdims=True)
    r_ties = num_neg - cnt_gt            # how many exact ties still to take
    tie = valid & (u == t_thr)

    # (b) stable tie-break = take ties in ascending box-index order:
    #     binary-search the smallest cutoff M with count(tie & j < M) >= r_ties.
    n_iters = max(1, int(math.ceil(math.log2(n_pad))))

    def m_body(_, carry):
        lo, hi = carry
        mid = jnp.right_shift(lo + hi, 1)
        cnt = jnp.sum((tie & (j_idx < mid)).astype(jnp.int32),
                      axis=1, keepdims=True)
        take_hi = cnt >= r_ties
        return jnp.where(take_hi, lo, mid), jnp.where(take_hi, mid, hi)

    _, m_cut = jax.lax.fori_loop(
        0, n_iters, m_body,
        (jnp.zeros((1, 1), jnp.int32), jnp.full((1, 1), n_pad, jnp.int32)))

    neg = (valid & (u > t_thr)) | (tie & (j_idx < m_cut) & (r_ties > 0))
    selected = jnp.logical_or(pos, neg)
    ce_sum = jnp.sum(jnp.where(selected, ce, 0.0), axis=1, keepdims=True)

    # ---- lane-dense partials row: lanes 0/1/2 = num_matched / loc / ce ----
    lane = jax.lax.broadcasted_iota(jnp.int32, (1, 128), 1)
    out_ref[0] = (jnp.where(lane == 0, num_matched, 0.0)
                  + jnp.where(lane == 1, loc_sum, 0.0)
                  + jnp.where(lane == 2, ce_sum, 0.0))


# ----------------------------------------------------------------------------
# Wrapper: lane-dense relayout + pad, ONE pallas_call, tiny XLA epilogue.
# ----------------------------------------------------------------------------
def multibox_loss(loc_p, loc_t, conf_p, conf_t, *,
                  vmem_limit_bytes=32 * 1024 * 1024):
    B, N, C = conf_p.shape
    n_pad = max(_round_up(N, 128), 128)
    pad = n_pad - N

    # Lane-dense relayout (boxes -> last / 128-lane axis).  NOTE: in a real
    # pipeline the producer should emit (B, C, N) / (B, 4, N) directly so this
    # transpose (one extra memory-bound HBM pass over conf_p/loc) disappears.
    conf_p_t = jnp.transpose(conf_p, (0, 2, 1)).astype(jnp.float32)
    loc_p_t = jnp.transpose(loc_p, (0, 2, 1)).astype(jnp.float32)
    loc_t_t = jnp.transpose(loc_t, (0, 2, 1)).astype(jnp.float32)
    conf_t_r = conf_t.astype(jnp.int32)[:, None, :]                # (B, 1, N)
    if pad:
        # conf_t padding MUST stay class 0: pads are masked by `valid` in the
        # kernel and class-0 pads can never become positives.
        conf_p_t = jnp.pad(conf_p_t, ((0, 0), (0, 0), (0, pad)))
        loc_p_t = jnp.pad(loc_p_t, ((0, 0), (0, 0), (0, pad)))
        loc_t_t = jnp.pad(loc_t_t, ((0, 0), (0, 0), (0, pad)))
        conf_t_r = jnp.pad(conf_t_r, ((0, 0), (0, 0), (0, pad)))

    parts = pl.pallas_call(
        functools.partial(_multibox_kernel, n_boxes=N),
        out_shape=jax.ShapeDtypeStruct((B, 1, 128), jnp.float32),
        grid_spec=pltpu.PrefetchScalarGridSpec(
            num_scalar_prefetch=0,
            grid=(B,),
            in_specs=[
                pl.BlockSpec((1, 1, n_pad), lambda b: (b, 0, 0)),
                pl.BlockSpec((1, C, n_pad), lambda b: (b, 0, 0)),
                pl.BlockSpec((1, 4, n_pad), lambda b: (b, 0, 0)),
                pl.BlockSpec((1, 4, n_pad), lambda b: (b, 0, 0)),
            ],
            out_specs=pl.BlockSpec((1, 1, 128), lambda b: (b, 0, 0)),
        ),
        compiler_params=pltpu.CompilerParams(
            dimension_semantics=("parallel",),
            vmem_limit_bytes=vmem_limit_bytes),
    )(conf_t_r, conf_p_t, loc_p_t, loc_t_t)

    num_matched = jnp.sum(parts[:, 0, 0])
    loc_loss = jnp.sum(parts[:, 0, 1])
    ce_loss = jnp.sum(parts[:, 0, 2])
    total = (loc_loss + ce_loss) / jnp.maximum(num_matched, 1.0)
    # num_matched == 0 -> 0, mirroring the module's early return.
    return jnp.where(num_matched > 0.0, total, 0.0)
    # TODO(synk): the PyTorch module's `print(...)` side effects are dropped.


multibox_loss_jit = jax.jit(multibox_loss, static_argnames=("vmem_limit_bytes",))


def multibox_loss_ref(loc_p, loc_t, conf_p, conf_t):
    """Pure-JAX reference with identical math (stable descending rank)."""
    B, N, C = conf_p.shape
    pos = conf_t > 0
    num_matched = jnp.sum(pos.astype(jnp.float32))

    d = loc_p - loc_t
    ad = jnp.abs(d)
    sl1 = jnp.where(ad < 1.0, 0.5 * d * d, ad - 0.5)
    loc_loss = jnp.sum(jnp.sum(sl1, -1) * pos.astype(jnp.float32))

    lse = jax.scipy.special.logsumexp(conf_p, axis=-1)
    gathered = jnp.take_along_axis(conf_p, conf_t[..., None], axis=-1)[..., 0]
    ce = lse - gathered

    c_mined = jnp.where(pos, 0.0, ce)
    cj = c_mined[:, :, None]
    ck = c_mined[:, None, :]
    jdx = jnp.arange(N)[None, :, None]
    kdx = jnp.arange(N)[None, None, :]
    rank = jnp.sum(((ck > cj) | ((ck == cj) & (kdx < jdx))).astype(jnp.int32),
                   axis=2)

    num_pos = jnp.sum(pos.astype(jnp.int32), axis=1, keepdims=True)
    num_neg = jnp.minimum(num_pos * 3, N - 1)
    neg = rank < num_neg
    sel = pos | neg
    ce_loss = jnp.sum(jnp.where(sel, ce, 0.0))

    total = (loc_loss + ce_loss) / jnp.maximum(num_matched, 1.0)
    return jnp.where(num_matched > 0, total, 0.0)


if __name__ == "__main__":
    key = jax.random.PRNGKey(0)
    k1, k2, k3, k4, k5 = jax.random.split(key, 5)

    # Small shapes; N is not a multiple of 128 so the padding path is exercised.
    B, N, C = 2, 200, 8
    loc_p = jax.random.normal(k1, (B, N, 4), jnp.float32)
    loc_t = jax.random.normal(k2, (B, N, 4), jnp.float32)
    conf_p = jax.random.normal(k3, (B, N, C), jnp.float32)
    labels = jax.random.randint(k4, (B, N), 1, C, jnp.int32)
    is_pos = jax.random.uniform(k5, (B, N)) < 0.2     # ~20% positives -> real mining
    conf_t = jnp.where(is_pos, labels, 0).astype(jnp.int32)

    out = multibox_loss_jit(loc_p, loc_t, conf_p, conf_t)
    jax.block_until_ready(out)
    ref = multibox_loss_ref(loc_p, loc_t, conf_p, conf_t)
    np.testing.assert_allclose(np.asarray(out), np.asarray(ref),
                               rtol=1e-4, atol=1e-4)

    # num_matched == 0 path (module's early return of 0).
    conf_t0 = jnp.zeros_like(conf_t)
    out0 = multibox_loss_jit(loc_p, loc_t, conf_p, conf_t0)
    jax.block_until_ready(out0)
    np.testing.assert_allclose(np.asarray(out0), 0.0, atol=1e-6)

    print("KERNEL_OK")
</pallas_src>

<mosaic_0001>
module attributes {stable_mosaic.version = 11 : i64} {
  func.func @_multibox_kernel(%arg0: i32, %arg1: memref<1x1x256xi32, #tpu.memory_space<vmem>>, %arg2: memref<1x8x256xf32, #tpu.memory_space<vmem>>, %arg3: memref<1x4x256xf32, #tpu.memory_space<vmem>>, %arg4: memref<1x4x256xf32, #tpu.memory_space<vmem>>, %arg5: memref<1x1x128xf32, #tpu.memory_space<vmem>>) attributes {dimension_semantics = [#tpu.dimension_semantics<parallel>], iteration_bounds = array<i64: 2>, scalar_prefetch = 0 : i64, scratch_operands = 0 : i64, tpu.core_type = #tpu.core_type<tc>, window_params = [{transform_indices = @transform_0, window_bounds = array<i64: 1, 1, 256>}, {transform_indices = @transform_1, window_bounds = array<i64: 1, 8, 256>}, {transform_indices = @transform_2, window_bounds = array<i64: 1, 4, 256>}, {transform_indices = @transform_3, window_bounds = array<i64: 1, 4, 256>}, {transform_indices = @transform_4, window_bounds = array<i64: 1, 1, 128>}]} {
    %c0 = arith.constant 0 : index
    %c0_0 = arith.constant 0 : index
    %c0_1 = arith.constant 0 : index
    %0 = vector.load %arg1[%c0, %c0_0, %c0_1] : memref<1x1x256xi32, #tpu.memory_space<vmem>>, vector<1x1x256xi32>
    %1 = vector.shape_cast %0 : vector<1x1x256xi32> to vector<1x256xi32>
    %c0_2 = arith.constant 0 : index
    %c0_3 = arith.constant 0 : index
    %c0_4 = arith.constant 0 : index
    %2 = vector.load %arg2[%c0_2, %c0_3, %c0_4] : memref<1x8x256xf32, #tpu.memory_space<vmem>>, vector<1x8x256xf32>
    %3 = vector.shape_cast %2 : vector<1x8x256xf32> to vector<8x256xf32>
    %c0_5 = arith.constant 0 : index
    %c0_6 = arith.constant 0 : index
    %c0_7 = arith.constant 0 : index
    %4 = vector.load %arg3[%c0_5, %c0_6, %c0_7] : memref<1x4x256xf32, #tpu.memory_space<vmem>>, vector<1x4x256xf32>
    %5 = vector.shape_cast %4 : vector<1x4x256xf32> to vector<4x256xf32>
    %c0_8 = arith.constant 0 : index
    %c0_9 = arith.constant 0 : index
    %c0_10 = arith.constant 0 : index
    %6 = vector.load %arg4[%c0_8, %c0_9, %c0_10] : memref<1x4x256xf32, #tpu.memory_space<vmem>>, vector<1x4x256xf32>
    %7 = vector.shape_cast %6 : vector<1x4x256xf32> to vector<4x256xf32>
    %8 = tpu.iota {dimensions = array<i32: 1>} : vector<1x256xi32>
    %c200_i32 = arith.constant 200 : i32
    %9 = vector.broadcast %c200_i32 : i32 to vector<1x256xi32>
    %10 = arith.cmpi slt, %8, %9 : vector<1x256xi32>
    %c0_i32 = arith.constant 0 : i32
    %11 = vector.broadcast %c0_i32 : i32 to vector<1x256xi32>
    %12 = arith.cmpi sgt, %1, %11 : vector<1x256xi32>
    %13 = arith.andi %12, %10 : vector<1x256xi1>
    %14 = arith.extui %13 : vector<1x256xi1> to vector<1x256xi32>
    %15 = arith.sitofp %14 : vector<1x256xi32> to vector<1x256xf32>
    %cst = arith.constant dense<0.000000e+00> : vector<1xf32>
    %16 = vector.multi_reduction <add>, %15, %cst [1] : vector<1x256xf32> to vector<1xf32>
    %17 = vector.shape_cast %16 : vector<1xf32> to vector<1x1xf32>
    %18 = arith.subf %5, %7 : vector<4x256xf32>
    %19 = math.absf %18 : vector<4x256xf32>
    %cst_11 = arith.constant 1.000000e+00 : f32
    %20 = vector.broadcast %cst_11 : f32 to vector<4x256xf32>
    %21 = arith.cmpf olt, %19, %20 : vector<4x256xf32>
    %cst_12 = arith.constant 5.000000e-01 : f32
    %22 = vector.broadcast %cst_12 : f32 to vector<4x256xf32>
    %23 = arith.mulf %22, %18 : vector<4x256xf32>
    %24 = arith.mulf %23, %18 : vector<4x256xf32>
    %cst_13 = arith.constant 5.000000e-01 : f32
    %25 = vector.broadcast %cst_13 : f32 to vector<4x256xf32>
    %26 = arith.subf %19, %25 : vector<4x256xf32>
    %27 = arith.select %21, %24, %26 : vector<4x256xi1>, vector<4x256xf32>
    %cst_14 = arith.constant dense<0.000000e+00> : vector<256xf32>
    %28 = vector.multi_reduction <add>, %27, %cst_14 [0] : vector<4x256xf32> to vector<256xf32>
    %29 = vector.shape_cast %28 : vector<256xf32> to vector<1x256xf32>
    %30 = arith.mulf %29, %15 : vector<1x256xf32>
    %cst_15 = arith.constant dense<0.000000e+00> : vector<1xf32>
    %31 = vector.multi_reduction <add>, %30, %cst_15 [1] : vector<1x256xf32> to vector<1xf32>
    %32 = vector.shape_cast %31 : vector<1xf32> to vector<1x1xf32>
    %cst_16 = arith.constant dense<0xFF800000> : vector<256xf32>
    %33 = vector.multi_reduction <maximumf>, %3, %cst_16 [0] : vector<8x256xf32> to vector<256xf32>
    %34 = vector.shape_cast %33 : vector<256xf32> to vector<1x256xf32>
    %35 = vector.broadcast %34 : vector<1x256xf32> to vector<8x256xf32>
    %36 = arith.subf %3, %35 : vector<8x256xf32>
    %37 = math.exp %36 : vector<8x256xf32>
    %cst_17 = arith.constant dense<0.000000e+00> : vector<256xf32>
    %38 = vector.multi_reduction <add>, %37, %cst_17 [0] : vector<8x256xf32> to vector<256xf32>
    %39 = vector.shape_cast %38 : vector<256xf32> to vector<1x256xf32>
    %40 = math.log %39 : vector<1x256xf32>
    %41 = arith.addf %40, %34 : vector<1x256xf32>
    %42 = tpu.iota {dimensions = array<i32: 0>} : vector<8x256xi32>
    %43 = vector.broadcast %1 : vector<1x256xi32> to vector<8x256xi32>
    %44 = arith.cmpi eq, %42, %43 : vector<8x256xi32>
    %cst_18 = arith.constant 0.000000e+00 : f32
    %45 = vector.broadcast %cst_18 : f32 to vector<8x256xf32>
    %46 = arith.select %44, %3, %45 : vector<8x256xi1>, vector<8x256xf32>
    %cst_19 = arith.constant dense<0.000000e+00> : vector<256xf32>
    %47 = vector.multi_reduction <add>, %46, %cst_19 [0] : vector<8x256xf32> to vector<256xf32>
    %48 = vector.shape_cast %47 : vector<256xf32> to vector<1x256xf32>
    %49 = arith.subf %41, %48 : vector<1x256xf32>
    %cst_20 = arith.constant 0.000000e+00 : f32
    %50 = vector.broadcast %cst_20 : f32 to vector<1x256xf32>
    %51 = arith.select %10, %49, %50 : vector<1x256xi1>, vector<1x256xf32>
    %cst_21 = arith.constant 0.000000e+00 : f32
    %52 = vector.broadcast %cst_21 : f32 to vector<1x256xf32>
    %53 = arith.select %13, %52, %51 : vector<1x256xi1>, vector<1x256xf32>
    %cst_22 = arith.constant 0.000000e+00 : f32
    %54 = vector.broadcast %cst_22 : f32 to vector<1x256xf32>
    %55 = arith.maximumf %53, %54 : vector<1x256xf32>
    %56 = tpu.bitcast %55 : vector<1x256xf32> -> vector<1x256xi32>
    %57 = arith.extui %13 : vector<1x256xi1> to vector<1x256xi32>
    %cst_23 = arith.constant dense<0> : vector<1xi32>
    %58 = vector.multi_reduction <add>, %57, %cst_23 [1] : vector<1x256xi32> to vector<1xi32>
    %59 = vector.shape_cast %58 : vector<1xi32> to vector<1x1xi32>
    %c3_i32 = arith.constant 3 : i32
    %60 = vector.broadcast %c3_i32 : i32 to vector<1x1xi32>
    %61 = arith.muli %59, %60 : vector<1x1xi32>
    %c199_i32 = arith.constant 199 : i32
    %62 = vector.broadcast %c199_i32 : i32 to vector<1x1xi32>
    %63 = arith.minsi %61, %62 : vector<1x1xi32>
    %c0_i32_24 = arith.constant 0 : i32
    %64 = vector.broadcast %c0_i32_24 : i32 to vector<1x1xi32>
    %c1073741824_i32 = arith.constant 1073741824 : i32
    %65 = vector.broadcast %c1073741824_i32 : i32 to vector<1x1xi32>
    %c0_i32_25 = arith.constant 0 : i32
    %c31_i32 = arith.constant 31 : i32
    %66 = arith.addi %c0_i32_25, %c31_i32 : i32
    %c1_i32 = arith.constant 1 : i32
    %67:2 = scf.for %arg6 = %c0_i32_25 to %66 step %c1_i32 iter_args(%arg7 = %64, %arg8 = %65) -> (vector<1x1xi32>, vector<1x1xi32>)  : i32 {
      %122 = arith.ori %arg7, %arg8 : vector<1x1xi32>
      %123 = vector.broadcast %122 : vector<1x1xi32> to vector<1x256xi32>
      %124 = arith.cmpi sge, %56, %123 : vector<1x256xi32>
      %125 = arith.andi %10, %124 : vector<1x256xi1>
      %126 = arith.extui %125 : vector<1x256xi1> to vector<1x256xi32>
      %cst_41 = arith.constant dense<0> : vector<1xi32>
      %127 = vector.multi_reduction <add>, %126, %cst_41 [1] : vector<1x256xi32> to vector<1xi32>
      %128 = vector.shape_cast %127 : vector<1xi32> to vector<1x1xi32>
      %129 = arith.cmpi sge, %128, %63 : vector<1x1xi32>
      %130 = arith.select %129, %122, %arg7 : vector<1x1xi1>, vector<1x1xi32>
      %c1_i32_42 = arith.constant 1 : i32
      %131 = vector.broadcast %c1_i32_42 : i32 to vector<1x1xi32>
      %132 = arith.shrsi %arg8, %131 : vector<1x1xi32>
      scf.yield %130, %132 : vector<1x1xi32>, vector<1x1xi32>
    }
    %68 = vector.broadcast %67#0 : vector<1x1xi32> to vector<1x256xi32>
    %69 = arith.cmpi sgt, %56, %68 : vector<1x256xi32>
    %70 = arith.andi %10, %69 : vector<1x256xi1>
    %71 = arith.extui %70 : vector<1x256xi1> to vector<1x256xi32>
    %cst_26 = arith.constant dense<0> : vector<1xi32>
    %72 = vector.multi_reduction <add>, %71, %cst_26 [1] : vector<1x256xi32> to vector<1xi32>
    %73 = vector.shape_cast %72 : vector<1xi32> to vector<1x1xi32>
    %74 = arith.subi %63, %73 : vector<1x1xi32>
    %75 = vector.broadcast %67#0 : vector<1x1xi32> to vector<1x256xi32>
    %76 = arith.cmpi eq, %56, %75 : vector<1x256xi32>
    %77 = arith.andi %10, %76 : vector<1x256xi1>
    %c0_i32_27 = arith.constant 0 : i32
    %78 = vector.broadcast %c0_i32_27 : i32 to vector<1x1xi32>
    %c256_i32 = arith.constant 256 : i32
    %79 = vector.broadcast %c256_i32 : i32 to vector<1x1xi32>
    %c0_i32_28 = arith.constant 0 : i32
    %c8_i32 = arith.constant 8 : i32
    %80 = arith.addi %c0_i32_28, %c8_i32 : i32
    %c1_i32_29 = arith.constant 1 : i32
    %81:2 = scf.for %arg6 = %c0_i32_28 to %80 step %c1_i32_29 iter_args(%arg7 = %78, %arg8 = %79) -> (vector<1x1xi32>, vector<1x1xi32>)  : i32 {
      %122 = arith.addi %arg7, %arg8 : vector<1x1xi32>
      %c1_i32_41 = arith.constant 1 : i32
      %123 = vector.broadcast %c1_i32_41 : i32 to vector<1x1xi32>
      %124 = arith.shrsi %122, %123 : vector<1x1xi32>
      %125 = vector.broadcast %124 : vector<1x1xi32> to vector<1x256xi32>
      %126 = arith.cmpi slt, %8, %125 : vector<1x256xi32>
      %127 = arith.andi %77, %126 : vector<1x256xi1>
      %128 = arith.extui %127 : vector<1x256xi1> to vector<1x256xi32>
      %cst_42 = arith.constant dense<0> : vector<1xi32>
      %129 = vector.multi_reduction <add>, %128, %cst_42 [1] : vector<1x256xi32> to vector<1xi32>
      %130 = vector.shape_cast %129 : vector<1xi32> to vector<1x1xi32>
      %131 = arith.cmpi sge, %130, %74 : vector<1x1xi32>
      %132 = arith.select %131, %arg7, %124 : vector<1x1xi1>, vector<1x1xi32>
      %133 = arith.select %131, %124, %arg8 : vector<1x1xi1>, vector<1x1xi32>
      scf.yield %132, %133 : vector<1x1xi32>, vector<1x1xi32>
    }
    %82 = vector.broadcast %67#0 : vector<1x1xi32> to vector<1x256xi32>
    %83 = arith.cmpi sgt, %56, %82 : vector<1x256xi32>
    %84 = arith.andi %10, %83 : vector<1x256xi1>
    %85 = vector.broadcast %81#1 : vector<1x1xi32> to vector<1x256xi32>
    %86 = arith.cmpi slt, %8, %85 : vector<1x256xi32>
    %87 = arith.andi %77, %86 : vector<1x256xi1>
    %c0_i32_30 = arith.constant 0 : i32
    %88 = vector.broadcast %c0_i32_30 : i32 to vector<1x1xi32>
    %89 = arith.cmpi sgt, %74, %88 : vector<1x1xi32>
    %90 = vector.broadcast %89 : vector<1x1xi1> to vector<1x256xi1>
    %91 = arith.andi %87, %90 : vector<1x256xi1>
    %92 = arith.ori %84, %91 : vector<1x256xi1>
    %93 = arith.ori %13, %92 : vector<1x256xi1>
    %cst_31 = arith.constant 0.000000e+00 : f32
    %94 = vector.broadcast %cst_31 : f32 to vector<1x256xf32>
    %95 = arith.select %93, %51, %94 : vector<1x256xi1>, vector<1x256xf32>
    %cst_32 = arith.constant dense<0.000000e+00> : vector<1xf32>
    %96 = vector.multi_reduction <add>, %95, %cst_32 [1] : vector<1x256xf32> to vector<1xf32>
    %97 = vector.shape_cast %96 : vector<1xf32> to vector<1x1xf32>
    %98 = tpu.iota {dimensions = array<i32: 1>} : vector<1x128xi32>
    %c0_i32_33 = arith.constant 0 : i32
    %99 = vector.broadcast %c0_i32_33 : i32 to vector<1x128xi32>
    %100 = arith.cmpi eq, %98, %99 : vector<1x128xi32>
    %cst_34 = arith.constant 0.000000e+00 : f32
    %101 = vector.shape_cast %17 : vector<1x1xf32> to vector<1x1xf32>
    %102 = vector.broadcast %101 : vector<1x1xf32> to vector<1x128xf32>
    %103 = vector.broadcast %cst_34 : f32 to vector<1x128xf32>
    %104 = arith.select %100, %102, %103 : vector<1x128xi1>, vector<1x128xf32>
    %c1_i32_35 = arith.constant 1 : i32
    %105 = vector.broadcast %c1_i32_35 : i32 to vector<1x128xi32>
    %106 = arith.cmpi eq, %98, %105 : vector<1x128xi32>
    %cst_36 = arith.constant 0.000000e+00 : f32
    %107 = vector.shape_cast %32 : vector<1x1xf32> to vector<1x1xf32>
    %108 = vector.broadcast %107 : vector<1x1xf32> to vector<1x128xf32>
    %109 = vector.broadcast %cst_36 : f32 to vector<1x128xf32>
    %110 = arith.select %106, %108, %109 : vector<1x128xi1>, vector<1x128xf32>
    %111 = arith.addf %104, %110 : vector<1x128xf32>
    %c2_i32 = arith.constant 2 : i32
    %112 = vector.broadcast %c2_i32 : i32 to vector<1x128xi32>
    %113 = arith.cmpi eq, %98, %112 : vector<1x128xi32>
    %cst_37 = arith.constant 0.000000e+00 : f32
    %114 = vector.shape_cast %97 : vector<1x1xf32> to vector<1x1xf32>
    %115 = vector.broadcast %114 : vector<1x1xf32> to vector<1x128xf32>
    %116 = vector.broadcast %cst_37 : f32 to vector<1x128xf32>
    %117 = arith.select %113, %115, %116 : vector<1x128xi1>, vector<1x128xf32>
    %118 = arith.addf %111, %117 : vector<1x128xf32>
    %c0_38 = arith.constant 0 : index
    %c0_39 = arith.constant 0 : index
    %c0_40 = arith.constant 0 : index
    %119 = vector.load %arg5[%c0_38, %c0_39, %c0_40] : memref<1x1x128xf32, #tpu.memory_space<vmem>>, vector<1x1x128xf32>
    %120 = vector.shape_cast %119 : vector<1x1x128xf32> to vector<1x128xf32>
    %121 = vector.shape_cast %118 : vector<1x128xf32> to vector<1x1x128xf32>
    tpu.vector_store %arg5[%c0_38, %c0_39, %c0_40], %121 {strides = array<i32>} : memref<1x1x128xf32, #tpu.memory_space<vmem>>, vector<1x1x128xf32>,
    return
  }
  func.func @transform_0(%arg0: i32) -> (i32, i32, i32) {
    %c0_i32 = arith.constant 0 : i32
    %c0_i32_0 = arith.constant 0 : i32
    %c0_i32_1 = arith.constant 0 : i32
    return %arg0, %c0_i32, %c0_i32_0 : i32, i32, i32
  }
  func.func @transform_1(%arg0: i32) -> (i32, i32, i32) {
    %c0_i32 = arith.constant 0 : i32
    %c0_i32_0 = arith.constant 0 : i32
    %c0_i32_1 = arith.constant 0 : i32
    return %arg0, %c0_i32, %c0_i32_0 : i32, i32, i32
  }
  func.func @transform_2(%arg0: i32) -> (i32, i32, i32) {
    %c0_i32 = arith.constant 0 : i32
    %c0_i32_0 = arith.constant 0 : i32
    %c0_i32_1 = arith.constant 0 : i32
    return %arg0, %c0_i32, %c0_i32_0 : i32, i32, i32
  }
  func.func @transform_3(%arg0: i32) -> (i32, i32, i32) {
    %c0_i32 = arith.constant 0 : i32
    %c0_i32_0 = arith.constant 0 : i32
    %c0_i32_1 = arith.constant 0 : i32
    return %arg0, %c0_i32, %c0_i32_0 : i32, i32, i32
  }
  func.func @transform_4(%arg0: i32) -> (i32, i32, i32) {
    %c0_i32 = arith.constant 0 : i32
    %c0_i32_0 = arith.constant 0 : i32
    %c0_i32_1 = arith.constant 0 : i32
    return %arg0, %c0_i32, %c0_i32_0 : i32, i32, i32
  }
}

</mosaic_0001>

<llo_original>
// kernel: multibox_loss.1
$region0: #{multibox_loss.1}
  #allocation0 [shape = 'u32[]', space=smem, size = 0x4, offset = 0x4, fixed_abs, tag = 'smem constant byte address 0x4 - core index']
  #allocation1 [shape = 'u32[72,128]{1,0:T(1,128)}', space=vmem, size = 0x9000, scoped, tag = 'internal scratch']
  %s0 = inlined_call_operand.vmem [shape: s32[2,1,256], index: 0, kind: input, shape index: {}]
  %s1 = inlined_call_operand.vmem [shape: f32[2,8,256], index: 1, kind: input, shape index: {}]
  %s2 = inlined_call_operand.vmem [shape: f32[2,4,256], index: 2, kind: input, shape index: {}]
  %s3 = inlined_call_operand.vmem [shape: f32[2,4,256], index: 3, kind: input, shape index: {}]
  %s4 = inlined_call_operand.vmem [shape: f32[2,1,128], index: 4, kind: output, shape index: {}]
  %s5 = sld [smem:[#allocation0]]
  $region63: #{multibox_loss.1} parent=0
    _
  %s7 = ssub.s32 1, %s5
  %s8 = scalar_select 0, %s7, %s5
  loop: start=0, step=1, limit=4
  $region2: #{multibox_loss.1} parent=0 // loop_pre_header
    _
  $region3: #{multibox_loss.1} parent=0 // loop_header
    %s10 = sphi 0, %s14
    %p11 = scmp.ge.s32.totalorder %s10, 4
    %s20 = sphi 0, %s22
    %s23 = sphi 0, %s20
    %s24 = sphi 0, %s23
    %s40 = sphi 0, %s24
    %s46 = sphi 0, %s48
    %s49 = sphi 0, %s46
    %s50 = sphi 0, %s49
    %s66 = sphi 0, %s50
    %s72 = sphi 0, %s74
    %s75 = sphi 0, %s72
    %s76 = sphi 0, %s75
    %s92 = sphi 0, %s76
    %s98 = sphi 0, %s100
    %s101 = sphi 0, %s98
    %s102 = sphi 0, %s101
    %s118 = sphi 0, %s102
    %s124 = sphi 0, %s126
    %s127 = sphi 0, %s124
    %s128 = sphi 0, %s127
    %s144 = sphi 0, %s128
  $region4: #{multibox_loss.1} parent=0 // loop_header_branch
    %13 = sbr.rel (%p11) target = $region8
  $region5: #{multibox_loss.1} parent=0 // loop_body
    %s15 = ssub.s32 %s10, 1
    %s16 = ssub.s32 %s10, 2
    %s17 = sadd.s32 %s10, 1
    %s18 = ssub.s32 %s10, %s17
    %p19 = scmp.eq.s32.totalorder %s18, 0
    %s21 = sadd.s32 %s20, 1
    %s22 = scalar_select %p19, %s20, %s21
    %p25 = pneg %p19
    %p26 = scmp.eq.s32.totalorder %s10, 1
    %p27 = por %p25, %p26
    %p28 = scmp.ne.s32.totalorder %s20, %s23
    %p29 = scmp.eq.s32.totalorder %s10, 0
    %p30 = por %p28, %p29
    %p31 = scmp.ne.s32.totalorder %s20, %s23
    %p32 = scmp.eq.s32.totalorder %s15, 1
    %p33 = por %p31, %p32
    %p34 = scmp.ne.s32.totalorder %s23, %s24
    %p35 = scmp.eq.s32.totalorder %s15, 0
    %p36 = por %p34, %p35
    %p37 = scmp.ne.s32.totalorder %s23, %s24
    %p38 = scmp.eq.s32.totalorder %s16, 1
    %p39 = por %p37, %p38
    %p41 = scmp.ne.s32.totalorder %s24, %s40
    %p42 = scmp.eq.s32.totalorder %s16, 0
    %p43 = por %p41, %p42
    %s44 = ssub.s32 %s10, %s17
    %p45 = scmp.eq.s32.totalorder %s44, 0
    %s47 = sadd.s32 %s46, 1
    %s48 = scalar_select %p45, %s46, %s47
    %p51 = pneg %p45
    %p52 = scmp.eq.s32.totalorder %s10, 1
    %p53 = por %p51, %p52
    %p54 = scmp.ne.s32.totalorder %s46, %s49
    %p55 = scmp.eq.s32.totalorder %s10, 0
    %p56 = por %p54, %p55
    %p57 = scmp.ne.s32.totalorder %s46, %s49
    %p58 = scmp.eq.s32.totalorder %s15, 1
    %p59 = por %p57, %p58
    %p60 = scmp.ne.s32.totalorder %s49, %s50
    %p61 = scmp.eq.s32.totalorder %s15, 0
    %p62 = por %p60, %p61
    %p63 = scmp.ne.s32.totalorder %s49, %s50
    %p64 = scmp.eq.s32.totalorder %s16, 1
    %p65 = por %p63, %p64
    %p67 = scmp.ne.s32.totalorder %s50, %s66
    %p68 = scmp.eq.s32.totalorder %s16, 0
    %p69 = por %p67, %p68
    %s70 = ssub.s32 %s10, %s17
    %p71 = scmp.eq.s32.totalorder %s70, 0
    %s73 = sadd.s32 %s72, 1
    %s74 = scalar_select %p71, %s72, %s73
    %p77 = pneg %p71
    %p78 = scmp.eq.s32.totalorder %s10, 1
    %p79 = por %p77, %p78
    %p80 = scmp.ne.s32.totalorder %s72, %s75
    %p81 = scmp.eq.s32.totalorder %s10, 0
    %p82 = por %p80, %p81
    %p83 = scmp.ne.s32.totalorder %s72, %s75
    %p84 = scmp.eq.s32.totalorder %s15, 1
    %p85 = por %p83, %p84
    %p86 = scmp.ne.s32.totalorder %s75, %s76
    %p87 = scmp.eq.s32.totalorder %s15, 0
    %p88 = por %p86, %p87
    %p89 = scmp.ne.s32.totalorder %s75, %s76
    %p90 = scmp.eq.s32.totalorder %s16, 1
    %p91 = por %p89, %p90
    %p93 = scmp.ne.s32.totalorder %s76, %s92
    %p94 = scmp.eq.s32.totalorder %s16, 0
    %p95 = por %p93, %p94
    %s96 = ssub.s32 %s10, %s17
    %p97 = scmp.eq.s32.totalorder %s96, 0
    %s99 = sadd.s32 %s98, 1
    %s100 = scalar_select %p97, %s98, %s99
    %p103 = pneg %p97
    %p104 = scmp.eq.s32.totalorder %s10, 1
    %p105 = por %p103, %p104
    %p106 = scmp.ne.s32.totalorder %s98, %s101
    %p107 = scmp.eq.s32.totalorder %s10, 0
    %p108 = por %p106, %p107
    %p109 = scmp.ne.s32.totalorder %s98, %s101
    %p110 = scmp.eq.s32.totalorder %s15, 1
    %p111 = por %p109, %p110
    %p112 = scmp.ne.s32.totalorder %s101, %s102
    %p113 = scmp.eq.s32.totalorder %s15, 0
    %p114 = por %p112, %p113
    %p115 = scmp.ne.s32.totalorder %s101, %s102
    %p116 = scmp.eq.s32.totalorder %s16, 1
    %p117 = por %p115, %p116
    %p119 = scmp.ne.s32.totalorder %s102, %s118
    %p120 = scmp.eq.s32.totalorder %s16, 0
    %p121 = por %p119, %p120
    %s122 = ssub.s32 %s10, %s17
    %p123 = scmp.eq.s32.totalorder %s122, 0
    %s125 = sadd.s32 %s124, 1
    %s126 = scalar_select %p123, %s124, %s125
    %p129 = pneg %p123
    %p130 = scmp.eq.s32.totalorder %s10, 1
    %p131 = por %p129, %p130
    %p132 = scmp.ne.s32.totalorder %s124, %s127
    %p133 = scmp.eq.s32.totalorder %s10, 0
    %p134 = por %p132, %p133
    %p135 = scmp.ne.s32.totalorder %s124, %s127
    %p136 = scmp.eq.s32.totalorder %s15, 1
    %p137 = por %p135, %p136
    %p138 = scmp.ne.s32.totalorder %s127, %s128
    %p139 = scmp.eq.s32.totalorder %s15, 0
    %p140 = por %p138, %p139
    %p141 = scmp.ne.s32.totalorder %s127, %s128
    %p142 = scmp.eq.s32.totalorder %s16, 1
    %p143 = por %p141, %p142
    %p145 = scmp.ne.s32.totalorder %s128, %s144
    %p146 = scmp.eq.s32.totalorder %s16, 0
    %p147 = por %p145, %p146
    %p148 = scmp.le.s32.totalorder 1, %s10
    %p149 = scmp.lt.s32.totalorder %s10, 3
    %p150 = pnand %p148, %p149
    %p151 = pneg %p150
    // Predicated region
    $region9: #{multibox_loss.1} parent=5 // pred_check
      _
    $region10: #{multibox_loss.1} parent=5 // pred_check_branch
      %153 = sbr.rel (%p150) target = $region12
    $region11: #{multibox_loss.1} parent=5 // pred_region
      %s154 = ssub.s32 %s10, 1
    $region12: #{multibox_loss.1} parent=5 // pred_fallthru
      _
    %p155 = scmp.lt.s32.totalorder %s10, 2
    // Predicated region
    $region13: #{multibox_loss.1} parent=5 // pred_check
      %p156 = pneg %p155
    $region14: #{multibox_loss.1} parent=5 // pred_check_branch
      %158 = sbr.rel (%p156) target = $region16
    $region15: #{multibox_loss.1} parent=5 // pred_region
      // Predicated region
      $region17: #{multibox_loss.1} parent=15 // pred_check
        %p159 = pneg %p30
      $region18: #{multibox_loss.1} parent=15 // pred_check_branch
        %161 = sbr.rel (%p159) target = $region20
      $region19: #{multibox_loss.1} parent=15 // pred_region
        %p162 = scmp.lt.s32.totalorder %s10, 1
        %s163 = scalar_select %p162, %s10, 1
        %s164 = smul.addr %s163, 2
        %s165 = scalar_lea.vmem %s0, %s164
      $region20: #{multibox_loss.1} parent=15 // pred_fallthru
        _
      // Predicated region
      $region21: #{multibox_loss.1} parent=15 // pred_check
        %p166 = pneg %p56
      $region22: #{multibox_loss.1} parent=15 // pred_check_branch
        %168 = sbr.rel (%p166) target = $region24
      $region23: #{multibox_loss.1} parent=15 // pred_region
        %p169 = scmp.lt.s32.totalorder %s10, 1
        %s170 = scalar_select %p169, %s10, 1
        %s171 = smul.addr %s170, 2
        %s172 = smul.addr %s171, 8
        %s173 = scalar_lea.vmem %s1, %s172
      $region24: #{multibox_loss.1} parent=15 // pred_fallthru
        _
      // Predicated region
      $region25: #{multibox_loss.1} parent=15 // pred_check
        %p174 = pneg %p82
      $region26: #{multibox_loss.1} parent=15 // pred_check_branch
        %176 = sbr.rel (%p174) target = $region28
      $region27: #{multibox_loss.1} parent=15 // pred_region
        %p177 = scmp.lt.s32.totalorder %s10, 1
        %s178 = scalar_select %p177, %s10, 1
        %s179 = smul.addr %s178, 2
        %s180 = smul.addr %s179, 4
        %s181 = scalar_lea.vmem %s2, %s180
      $region28: #{multibox_loss.1} parent=15 // pred_fallthru
        _
      // Predicated region
      $region29: #{multibox_loss.1} parent=15 // pred_check
        %p182 = pneg %p108
      $region30: #{multibox_loss.1} parent=15 // pred_check_branch
        %184 = sbr.rel (%p182) target = $region32
      $region31: #{multibox_loss.1} parent=15 // pred_region
        %p185 = scmp.lt.s32.totalorder %s10, 1
        %s186 = scalar_select %p185, %s10, 1
        %s187 = smul.addr %s186, 2
        %s188 = smul.addr %s187, 4
        %s189 = scalar_lea.vmem %s3, %s188
      $region32: #{multibox_loss.1} parent=15 // pred_fallthru
        _
    $region16: #{multibox_loss.1} parent=5 // pred_fallthru
      _
    %p190 = scmp.le.s32.totalorder 1, %s10
    %p191 = scmp.lt.s32.totalorder %s10, 3
    %p192 = pnand %p190, %p191
    %p193 = pneg %p192
    // Predicated region
    $region33: #{multibox_loss.1} parent=5 // pred_check
      _
    $region34: #{multibox_loss.1} parent=5 // pred_check_branch
      %195 = sbr.rel (%p192) target = $region36
    $region35: #{multibox_loss.1} parent=5 // pred_region
      %s196 = ssub.s32 %s10, 1
      %p197 = scmp.lt.s32.totalorder %s15, 1
      %s198 = scalar_select %p197, %s15, 1
      %s199 = smul.addr %s198, 2
      %s200 = scalar_lea.vmem %s0, %s199
      %p201 = pneg %p36
      %p202 = pneg %p33
      %p203 = scmp.lt.s32.totalorder %s15, 1
      %s204 = scalar_select %p203, %s15, 1
      %s205 = smul.addr %s204, 2
      %s206 = smul.addr %s205, 8
      %s207 = scalar_lea.vmem %s1, %s206
      %p208 = pneg %p62
      %p209 = pneg %p59
      %p210 = scmp.lt.s32.totalorder %s15, 1
      %s211 = scalar_select %p210, %s15, 1
      %s212 = smul.addr %s211, 2
      %s213 = smul.addr %s212, 4
      %s214 = scalar_lea.vmem %s2, %s213
      %p215 = pneg %p88
      %p216 = pneg %p85
      %p217 = scmp.lt.s32.totalorder %s15, 1
      %s218 = scalar_select %p217, %s15, 1
      %s219 = smul.addr %s218, 2
      %s220 = smul.addr %s219, 4
      %s221 = scalar_lea.vmem %s3, %s220
      %p222 = pneg %p114
      %p223 = pneg %p111
      %p224 = pneg %p140
      %p225 = pneg %p137
      %p226 = scmp.lt.s32.totalorder %s15, 1
      %s227 = scalar_select %p226, %s15, 1
      %s228 = scalar_lea.vmem %s4, %s227
      %p229 = scmp.lt.s32.totalorder %s15, 1
      %s230 = scalar_select %p229, %s15, 1
      %s231 = smul.addr %s230, 2
      %s232 = scalar_lea.vmem %s0, %s231
      %p233 = scmp.lt.s32.totalorder %s15, 1
      %s234 = scalar_select %p233, %s15, 1
      %s235 = smul.addr %s234, 2
      %s236 = smul.addr %s235, 8
      %s237 = scalar_lea.vmem %s1, %s236
      %p238 = scmp.lt.s32.totalorder %s15, 1
      %s239 = scalar_select %p238, %s15, 1
      %s240 = smul.addr %s239, 2
      %s241 = smul.addr %s240, 4
      %s242 = scalar_lea.vmem %s2, %s241
      %p243 = scmp.lt.s32.totalorder %s15, 1
      %s244 = scalar_select %p243, %s15, 1
      %s245 = smul.addr %s244, 2
      %s246 = smul.addr %s245, 4
      %s247 = scalar_lea.vmem %s3, %s246
      %p248 = scmp.lt.s32.totalorder %s15, 1
      %s249 = scalar_select %p248, %s15, 1
      %s250 = scalar_lea.vmem %s4, %s249
      %v251 = vld [vmem:[%s232] sm:$0x3]
      %v252 = vld [vmem:[%s237] sm:$0xff]
      %v253 = vld [vmem:[%s237 + $0x8] sm:$0xff]
      %v254 = vld [vmem:[%s242] sm:$0xff]
      %v255 = vld [vmem:[%s247] sm:$0xff]
      %v256 = vlaneseq
      %v257 = vand.u32 %v256, 127
      %v258 = vadd.s32 %v257, 128
      %vm259 = vcmp.lt.s32.totalorder %v257, 200
      %vm260 = vcmp.lt.s32.totalorder %v258, 200
      %vm261 = vcmp.gt.s32.totalorder %v251, 0
      %v262 = vsel %vm259, 1, 0
      %v263 = vsel %vm260, 1, 0
      %v264 = vrot.slane %v263, 7
      %vm265 = vcmask 1040384
      %v266 = vsel %vm265, %v262, %v264
      %vm267 = vcmp.ne.s32.totalorder %v266, 0
      %vm268 = vmand %vm261, %vm267
      %v269 = vsel %vm268, 1, 0
      %v270 = vcvt.s32.f32 %v269
      %v272 = vperm.slane %v270, 0
      %v273 = vperm.slane %v270, 1
      %v276 = vsel %vm265, %v272, 0.0
      %v277 = vsel %vm265, %v273, 0.0
      %v278 = vadd.f32 %v276, %v277
      %279 = vadd.xlane.f32.xlu0 %v278
      %v280 = vpop.xlane.xlu0 %279
      %v281 = vsub.f32 %v254, %v255
      %v282 = vand.u32 2147483647, %v281
      %vm283 = vcmp.lt.f32.partialorder %v282, 1.0
      %v284 = vmul.f32 %v281, 0.5
      %v285 = vmul.f32 %v284, %v281
      %v286 = vsub.f32 %v282, 0.5
      %v287 = vsel %vm283, %v285, %v286
      %289 = vst [vmem:[#allocation1] ss:$2 sm:$0xff] %v287
      %v290 = vld.sshfl [vmem:[#allocation1] sm:$0xff pattern:$0x75316420]
      %v291 = vld.sshfl [vmem:[#allocation1 + $0x8] sm:$0xff pattern:$0x75316420]
      %vm294 = vcmask 1043456
      %v295 = vsel %vm294, %v290, 0.0
      %v296 = vrot.slane %v295, 4
      %v297 = vadd.f32 %v295, %v296
      %v298 = vrot.slane %v297, 2
      %v299 = vadd.f32 %v297, %v298
      %v300 = vrot.slane %v299, 1
      %v301 = vadd.f32 %v299, %v300
      %v302 = vsel %vm294, %v291, 0.0
      %v303 = vrot.slane %v302, 4
      %v304 = vadd.f32 %v302, %v303
      %v305 = vrot.slane %v304, 2
      %v306 = vadd.f32 %v304, %v305
      %v307 = vrot.slane %v306, 1
      %v308 = vadd.f32 %v306, %v307
      %v309 = vmul.f32 %v301, %v272
      %v310 = vmul.f32 %v308, %v273
      %v311 = vsel %vm265, %v309, 0.0
      %v312 = vsel %vm265, %v310, 0.0
      %v313 = vadd.f32 %v311, %v312
      %314 = vadd.xlane.f32.xlu0 %v313
      %v315 = vpop.xlane.xlu0 %314
      %v316 = vrot.slane %v252, 4
      %v317 = vmax.f32 %v252, %v316
      %v318 = vrot.slane %v317, 2
      %v319 = vmax.f32 %v317, %v318
      %v320 = vrot.slane %v319, 1
      %v321 = vmax.f32 %v319, %v320
      %v322 = vrot.slane %v253, 4
      %v323 = vmax.f32 %v253, %v322
      %v324 = vrot.slane %v323, 2
      %v325 = vmax.f32 %v323, %v324
      %v326 = vrot.slane %v325, 1
      %v327 = vmax.f32 %v325, %v326
      %v328 = vsub.f32 %v252, %v321
      %v329 = vsub.f32 %v253, %v327
      %v330 = vmul.f32 %v328, 1.442695
      %v331 = vpow.pop %v330
      %v332 = vmul.f32 %v329, 1.442695
      %v333 = vpow.pop %v332
      %v334 = vrot.slane %v331, 4
      %v335 = vadd.f32 %v331, %v334
      %v336 = vrot.slane %v335, 2
      %v337 = vadd.f32 %v335, %v336
      %v338 = vrot.slane %v337, 1
      %v339 = vadd.f32 %v337, %v338
      %v340 = vrot.slane %v333, 4
      %v341 = vadd.f32 %v333, %v340
      %v342 = vrot.slane %v341, 2
      %v343 = vadd.f32 %v341, %v342
      %v344 = vrot.slane %v343, 1
      %v345 = vadd.f32 %v343, %v344
      %v346 = vlog2.pop %v339
      %v347 = vmul.f32 %v346, 0.6931472
      %v348 = vlog2.pop %v345
      %v349 = vmul.f32 %v348, 0.6931472
      %v350 = vadd.f32 %v347, %v321
      %v351 = vadd.f32 %v349, %v327
      %v352 = vlaneseq
      %v353 = vshrl.u32 %v352, 7
      %v354 = vperm.slane %v251, 0
      %v355 = vperm.slane %v251, 1
      %vm356 = vcmp.eq.s32.totalorder %v353, %v354
      %vm357 = vcmp.eq.s32.totalorder %v353, %v355
      %v358 = vsel %vm356, %v252, 0.0
      %v359 = vsel %vm357, %v253, 0.0
      %v360 = vrot.slane %v358, 4
      %v361 = vadd.f32 %v358, %v360
      %v362 = vrot.slane %v361, 2
      %v363 = vadd.f32 %v361, %v362
      %v364 = vrot.slane %v363, 1
      %v365 = vadd.f32 %v363, %v364
      %v366 = vrot.slane %v359, 4
      %v367 = vadd.f32 %v359, %v366
      %v368 = vrot.slane %v367, 2
      %v369 = vadd.f32 %v367, %v368
      %v370 = vrot.slane %v369, 1
      %v371 = vadd.f32 %v369, %v370
      %v372 = vsub.f32 %v350, %v365
      %v373 = vsub.f32 %v351, %v371
      %v374 = vsel %vm259, %v372, 0.0
      %v375 = vsel %vm260, %v373, 0.0
      %v378 = vrot.slane %v375, 7
      %v379 = vsel %vm265, %v374, %v378
      %v381 = vsel %vm268, 0.0, %v379
      %v382 = vmax.f32 %v381, 0.0
      %v384 = vperm.slane %v382, 0
      %v385 = vperm.slane %v382, 1
      %v386 = vperm.slane %v269, 0
      %v387 = vperm.slane %v269, 1
      %v388 = vsel %vm265, %v386, 0
      %v389 = vsel %vm265, %v387, 0
      %v390 = vadd.s32 %v388, %v389
      %v391 = vand.u32 %v390, 65535
      %v392 = vshrl.u32 %v390, 16
      %v393 = vcvt.s32.f32 %v391
      %v394 = vcvt.s32.f32 %v392
      %395 = vadd.xlane.f32.xlu0 %v393
      %v396 = vpop.xlane.xlu0 %395
      %397 = vadd.xlane.f32.xlu0 %v394
      %v398 = vpop.xlane.xlu0 %397
      %v399 = vcvt.f32.s32 %v396
      %v400 = vcvt.f32.s32 %v398
      %v401 = vshll.u32 %v400, 16
      %v402 = vadd.s32 %v401, %v399
      %v403 = vmul.u32 %v402, 3
      %vm404 = vcmp.lt.s32.totalorder %v403, 199
      %v405 = vsel %vm404, %v403, 199
      loop: start=0, step=1, limit=31
      $region37: #{multibox_loss.1} parent=35 // loop_pre_header
        _
      $region38: #{multibox_loss.1} parent=35 // loop_header
        %s407 = sphi 0, %s411
        %p408 = scmp.ge.s32.totalorder %s407, 31
        %v412 = vphi 0, %v437
        %v413 = vphi 1073741824, %v438
      $region39: #{multibox_loss.1} parent=35 // loop_header_branch
        %410 = sbr.rel (%p408) target = $region43
      $region40: #{multibox_loss.1} parent=35 // loop_body
        %v414 = vor.u32 %v412, %v413
        %vm415 = vcmp.ge.s32.totalorder %v384, %v414
        %vm416 = vcmp.ge.s32.totalorder %v385, %v414
        %vm417 = vmand %vm259, %vm415
        %vm418 = vmand %vm260, %vm416
        %v419 = vsel %vm417, 1, 0
        %v420 = vsel %vm418, 1, 0
        %v421 = vsel %vm265, %v419, 0
        %v422 = vsel %vm265, %v420, 0
        %v423 = vadd.s32 %v421, %v422
        %v424 = vand.u32 %v423, 65535
        %v425 = vshrl.u32 %v423, 16
        %v426 = vcvt.s32.f32 %v424
        %v427 = vcvt.s32.f32 %v425
        %428 = vadd.xlane.f32.xlu0 %v426
        %v429 = vpop.xlane.xlu0 %428
        %430 = vadd.xlane.f32.xlu0 %v427
        %v431 = vpop.xlane.xlu0 %430
        %v432 = vcvt.f32.s32 %v429
        %v433 = vcvt.f32.s32 %v431
        %v434 = vshll.u32 %v433, 16
        %v435 = vadd.s32 %v434, %v432
        %vm436 = vcmp.ge.s32.totalorder %v435, %v405
        %v437 = vsel %vm436, %v414, %v412
        %v438 = vshra.s32 %v413, 1
      $region41: #{multibox_loss.1} parent=35 // loop_footer
        %s411 = sadd.s32 1, %s407
      $region42: #{multibox_loss.1} parent=35 // loop_footer_branch
        %406 = sbr.rel target = $region38
      $region43: #{multibox_loss.1} parent=35 // loop_exit
        _
      %vm439 = vcmp.gt.s32.totalorder %v384, %v412
      %vm440 = vcmp.gt.s32.totalorder %v385, %v412
      %vm441 = vmand %vm259, %vm439
      %vm442 = vmand %vm260, %vm440
      %v443 = vsel %vm441, 1, 0
      %v444 = vsel %vm442, 1, 0
      %v445 = vsel %vm265, %v443, 0
      %v446 = vsel %vm265, %v444, 0
      %v447 = vadd.s32 %v445, %v446
      %v448 = vand.u32 %v447, 65535
      %v449 = vshrl.u32 %v447, 16
      %v450 = vcvt.s32.f32 %v448
      %v451 = vcvt.s32.f32 %v449
      %452 = vadd.xlane.f32.xlu0 %v450
      %v453 = vpop.xlane.xlu0 %452
      %454 = vadd.xlane.f32.xlu0 %v451
      %v455 = vpop.xlane.xlu0 %454
      %v456 = vcvt.f32.s32 %v453
      %v457 = vcvt.f32.s32 %v455
      %v458 = vshll.u32 %v457, 16
      %v459 = vadd.s32 %v458, %v456
      %v460 = vsub.s32 %v405, %v459
      %vm461 = vcmp.eq.s32.totalorder %v384, %v412
      %vm462 = vcmp.eq.s32.totalorder %v385, %v412
      %vm463 = vmand %vm259, %vm461
      %vm464 = vmand %vm260, %vm462
      loop: start=0, step=1, limit=8
      $region44: #{multibox_loss.1} parent=35 // loop_pre_header
        _
      $region45: #{multibox_loss.1} parent=35 // loop_header
        %s466 = sphi 0, %s470
        %p467 = scmp.ge.s32.totalorder %s466, 8
        %v471 = vphi 0, %v497
        %v472 = vphi 256, %v498
      $region46: #{multibox_loss.1} parent=35 // loop_header_branch
        %469 = sbr.rel (%p467) target = $region50
      $region47: #{multibox_loss.1} parent=35 // loop_body
        %v473 = vadd.s32 %v471, %v472
        %v474 = vshra.s32 %v473, 1
        %vm475 = vcmp.lt.s32.totalorder %v257, %v474
        %vm476 = vcmp.lt.s32.totalorder %v258, %v474
        %vm477 = vmand %vm463, %vm475
        %vm478 = vmand %vm464, %vm476
        %v479 = vsel %vm477, 1, 0
        %v480 = vsel %vm478, 1, 0
        %v481 = vsel %vm265, %v479, 0
        %v482 = vsel %vm265, %v480, 0
        %v483 = vadd.s32 %v481, %v482
        %v484 = vand.u32 %v483, 65535
        %v485 = vshrl.u32 %v483, 16
        %v486 = vcvt.s32.f32 %v484
        %v487 = vcvt.s32.f32 %v485
        %488 = vadd.xlane.f32.xlu0 %v486
        %v489 = vpop.xlane.xlu0 %488
        %490 = vadd.xlane.f32.xlu0 %v487
        %v491 = vpop.xlane.xlu0 %490
        %v492 = vcvt.f32.s32 %v489
        %v493 = vcvt.f32.s32 %v491
        %v494 = vshll.u32 %v493, 16
        %v495 = vadd.s32 %v494, %v492
        %vm496 = vcmp.ge.s32.totalorder %v495, %v460
        %v497 = vsel %vm496, %v471, %v474
        %v498 = vsel %vm496, %v474, %v472
      $region48: #{multibox_loss.1} parent=35 // loop_footer
        %s470 = sadd.s32 1, %s466
      $region49: #{multibox_loss.1} parent=35 // loop_footer_branch
        %465 = sbr.rel target = $region45
      $region50: #{multibox_loss.1} parent=35 // loop_exit
        _
      %vm499 = vcmp.lt.s32.totalorder %v257, %v472
      %vm500 = vcmp.lt.s32.totalorder %v258, %v472
      %vm501 = vmand %vm463, %vm499
      %vm502 = vmand %vm464, %vm500
      %vm503 = vcmp.gt.s32.totalorder %v460, 0
      %v504 = vsel %vm503, 1, 0
      %vm505 = vcmp.eq.s32.totalorder %v504, 1
      %vm506 = vmand %vm501, %vm505
      %vm507 = vmand %vm502, %vm505
      %vm508 = vmor %vm441, %vm506
      %vm509 = vmor %vm442, %vm507
      %v510 = vsel %vm508, 1, 0
      %v511 = vsel %vm509, 1, 0
      %v512 = vrot.slane %v511, 7
      %v513 = vsel %vm265, %v510, %v512
      %vm514 = vcmp.ne.s32.totalorder %v513, 0
      %vm515 = vmor %vm268, %vm514
      %v516 = vsel %vm515, %v379, 0.0
      %v518 = vperm.slane %v516, 0
      %v519 = vperm.slane %v516, 1
      %v522 = vsel %vm265, %v518, 0.0
      %v523 = vsel %vm265, %v519, 0.0
      %v524 = vadd.f32 %v522, %v523
      %525 = vadd.xlane.f32.xlu0 %v524
      %v526 = vpop.xlane.xlu0 %525
      %vm527 = vcmp.eq.s32.totalorder %v257, 0
      %v528 = vsel %vm527, %v280, 0.0
      %vm529 = vcmp.eq.s32.totalorder %v257, 1
      %v530 = vsel %vm529, %v315, 0.0
      %v531 = vadd.f32 %v528, %v530
      %vm532 = vcmp.eq.s32.totalorder %v257, 2
      %v533 = vsel %vm532, %v526, 0.0
      %v534 = vadd.f32 %v531, %v533
      %535 = vst [vmem:[%s250] sm:$0x1] %v534
      %p536 = scmp.lt.s32.totalorder %s15, 1
      %s537 = scalar_select %p536, %s15, 1
      %s538 = scalar_lea.vmem %s4, %s537
      // Predicated region
      $region51: #{multibox_loss.1} parent=35 // pred_check
        %p539 = pneg %p137
      $region52: #{multibox_loss.1} parent=35 // pred_check_branch
        %541 = sbr.rel (%p539) target = $region54
      $region53: #{multibox_loss.1} parent=35 // pred_region
        _
      $region54: #{multibox_loss.1} parent=35 // pred_fallthru
        _
    $region36: #{multibox_loss.1} parent=5 // pred_fallthru
      _
    %p542 = scmp.le.s32.totalorder 2, %s10
    // Predicated region
    $region55: #{multibox_loss.1} parent=5 // pred_check
      %p543 = pneg %p542
    $region56: #{multibox_loss.1} parent=5 // pred_check_branch
      %545 = sbr.rel (%p543) target = $region58
    $region57: #{multibox_loss.1} parent=5 // pred_region
      %s546 = ssub.s32 %s10, 2
      // Predicated region
      $region59: #{multibox_loss.1} parent=57 // pred_check
        %p547 = pneg %p143
      $region60: #{multibox_loss.1} parent=57 // pred_check_branch
        %549 = sbr.rel (%p547) target = $region62
      $region61: #{multibox_loss.1} parent=57 // pred_region
        %p550 = scmp.lt.s32.totalorder %s16, 1
        %s551 = scalar_select %p550, %s16, 1
        %s552 = scalar_lea.vmem %s4, %s551
      $region62: #{multibox_loss.1} parent=57 // pred_fallthru
        _
    $region58: #{multibox_loss.1} parent=5 // pred_fallthru
      _
  $region6: #{multibox_loss.1} parent=0 // loop_footer
    %s14 = sadd.s32 1, %s10
  $region7: #{multibox_loss.1} parent=0 // loop_footer_branch
    %9 = sbr.rel target = $region3
  $region8: #{multibox_loss.1} parent=0 // loop_exit
    _

</llo_original>
